<compile_context>
chip_gen: v7x
topology: tpu7x:2x2x1
jax: 0.10.0
libtpu: 0.0.40
codegen_flags: <defaults>
</compile_context>

<pallas_src>
import jax
import jax.numpy as jnp
from jax.experimental import pallas as pl
from jax.experimental.pallas import tpu as pltpu

INTWIDTH = 3
FRACWIDTH = 4
# bf16 MXU operands are exact only while fixed-point values carry <= 8
# significant bits (bf16 has an 8-bit significand).
assert INTWIDTH + FRACWIDTH <= 7, "bf16 MXU path needs <= 8 significant bits"

_SCALE = 2.0 ** FRACWIDTH
_QMAX = 2.0 ** (INTWIDTH + FRACWIDTH) - 1.0
_QMIN = -(2.0 ** (INTWIDTH + FRACWIDTH))

_LANE = 128     # lane tile (last dim)
_B_TILE = 8     # f32 sublane tile (second-to-last dim); also the batch grid block


def _trunc(x):
    # UnarySim Round: quantize to int{INTWIDTH}.frac{FRACWIDTH} fixed point.
    return jnp.clip(jnp.round(x * _SCALE), _QMIN, _QMAX) * (1.0 / _SCALE)


def _hub_hardsigmoid(x):
    # HUBHardsigmoid(x) = Hardsigmoid(3x) = clamp(x/2 + 1/2, 0, 1)
    return jnp.clip(x * 0.5 + 0.5, 0.0, 1.0)


def _hardtanh(x):
    # HUBHardtanh = Hardtanh(-1, 1)
    return jnp.clip(x, -1.0, 1.0)


def _ceil_to(n, m):
    return ((n + m - 1) // m) * m


def _pad_to(a, target_shape):
    pads = tuple((0, t - s) for s, t in zip(a.shape, target_shape))
    return jnp.pad(a, pads)


def mgu_seq_kernel(xcf_ref, xcn_ref, h0_ref, wfh_ref, wnh_ref, hy_ref, h_scr):
    """One timestep per grid point; hidden state carried in VMEM scratch."""
    t = pl.program_id(1)

    @pl.when(t == 0)
    def _():
        h_scr[...] = h0_ref[...]

    t_h = _trunc(h_scr[...])                     # trunc(hx), f32 VPU math
    h16 = t_h.astype(jnp.bfloat16)               # exact cast (<= 8 sig. bits)

    # Forget gate: only the hidden-side dot is on the serial path; the x-side
    # contribution + bias was precomputed for the whole sequence (xcf_ref).
    fg_lin = jnp.dot(h16, wfh_ref[...],
                     preferred_element_type=jnp.float32) + xcf_ref[0]
    t_fg = _trunc(_hub_hardsigmoid(_trunc(_hardtanh(fg_lin))))   # trunc(fg)
    t_fg_hx = _trunc(t_fg * t_h)                                 # trunc(fg_hx)

    # New gate.
    ng_lin = jnp.dot(t_fg_hx.astype(jnp.bfloat16), wnh_ref[...],
                     preferred_element_type=jnp.float32) + xcn_ref[0]
    ng = _hardtanh(_trunc(ng_lin))               # trunc(ng) == ng afterwards

    t_fg_ng = _trunc(t_fg * ng)                  # trunc(fg * ng)
    # fg_ng_inv = 0 - trunc(fg_ng); its re-truncation is identity (|.| <= 1).
    hy = _hardtanh(ng - t_fg_ng + t_fg_hx)

    hy_ref[0] = hy.astype(hy_ref.dtype)
    h_scr[...] = hy                              # carry (already on the fxp grid)


@jax.jit
def hard_mgu_sequence_fxp(xs, h0, weight_f, weight_n, bias_f, bias_n):
    """Run the MGU cell over a whole sequence inside ONE pallas_call.

    xs: (T, B, I) f32, h0: (B, H) f32, weight_*: (H, H+I) f32, bias_*: (H,) f32.
    Returns hy for every step: (T, B, H) f32.
    """
    T, B, I = xs.shape
    H = h0.shape[1]

    # One-time weight / bias quantization (off the per-step path).
    tw_f = _trunc(weight_f)
    tw_n = _trunc(weight_n)
    tb_f = _trunc(bias_f)
    tb_n = _trunc(bias_n)

    # hx-independent x-side contribution of BOTH gates for ALL timesteps:
    # big parallel matmuls in plain XLA, bias folded in.  Exact: bf16 operands
    # carry <= 8 significant bits, f32 accumulation of bounded fixed-point sums.
    t_x = _trunc(xs).astype(jnp.bfloat16).reshape(T * B, I)
    xcf = (jnp.dot(t_x, tw_f[:, H:].T.astype(jnp.bfloat16),
                   preferred_element_type=jnp.float32) + tb_f).reshape(T, B, H)
    xcn = (jnp.dot(t_x, tw_n[:, H:].T.astype(jnp.bfloat16),
                   preferred_element_type=jnp.float32) + tb_n).reshape(T, B, H)

    # Pad batch to the 8-sublane tile, hidden to the 128-lane tile (lane-dense
    # hy stores, full MXU tiles).  Zero padding is exact for this cell.
    Bp = _ceil_to(B, _B_TILE)
    Hp = _ceil_to(H, _LANE)

    xcf_p = _pad_to(xcf, (T, Bp, Hp))
    xcn_p = _pad_to(xcn, (T, Bp, Hp))
    h0_p = _pad_to(h0, (Bp, Hp))
    wfh = _pad_to(tw_f[:, :H].T, (Hp, Hp)).astype(jnp.bfloat16)   # (Hp, Hp)
    wnh = _pad_to(tw_n[:, :H].T, (Hp, Hp)).astype(jnp.bfloat16)   # (Hp, Hp)

    grid = (Bp // _B_TILE, T)

    vmem_needed = (
        2 * Hp * Hp * 2                     # resident bf16 recurrent weights
        + 2 * 2 * _B_TILE * Hp * 4          # double-buffered xcf/xcn blocks
        + 2 * _B_TILE * Hp * 4              # double-buffered hy block
        + 2 * _B_TILE * Hp * 4              # h0 block + hidden-state scratch
    )
    # TODO(synk): for H large enough that the resident (Hp, Hp) weights approach
    # v7x's 64 MiB VMEM, tile the hidden dots over N-blocks of Hp instead.
    vmem_limit = int(min(max(2 * vmem_needed, 16 << 20), 120 << 20))

    hy_p = pl.pallas_call(
        mgu_seq_kernel,
        out_shape=jax.ShapeDtypeStruct((T, Bp, Hp), xs.dtype),
        grid_spec=pltpu.PrefetchScalarGridSpec(
            num_scalar_prefetch=0,
            grid=grid,
            in_specs=[
                pl.BlockSpec((1, _B_TILE, Hp), lambda b, t: (t, b, 0)),  # xcf
                pl.BlockSpec((1, _B_TILE, Hp), lambda b, t: (t, b, 0)),  # xcn
                pl.BlockSpec((_B_TILE, Hp), lambda b, t: (b, 0)),        # h0
                pl.BlockSpec((Hp, Hp), lambda b, t: (0, 0)),             # wfh (resident)
                pl.BlockSpec((Hp, Hp), lambda b, t: (0, 0)),             # wnh (resident)
            ],
            out_specs=pl.BlockSpec((1, _B_TILE, Hp), lambda b, t: (t, b, 0)),
            scratch_shapes=[pltpu.VMEM((_B_TILE, Hp), jnp.float32)],     # hidden carry
        ),
        compiler_params=pltpu.CompilerParams(
            dimension_semantics=("parallel", "arbitrary"),
            vmem_limit_bytes=vmem_limit,
        ),
    )(xcf_p, xcn_p, h0_p, wfh, wnh)

    return hy_p[:, :B, :H]


@jax.jit
def hard_mgu_cell_fxp(x, hx, weight_f, weight_n, bias_f, bias_n):
    """Single-step forward matching HardMGUCellFXP.forward (hard=True, bias=True)."""
    return hard_mgu_sequence_fxp(x[None], hx, weight_f, weight_n, bias_f, bias_n)[0]


def _reference_forward(x, hx, weight_f, weight_n, bias_f, bias_n):
    """Pure-JAX mirror of HardMGUCellFXP.forward (exact reference ordering)."""
    T = _trunc
    fg_ug_in = jnp.concatenate([T(hx), T(x)], axis=1)
    fg_in = _hardtanh(jnp.dot(T(fg_ug_in), T(weight_f).T) + T(bias_f))
    fg = _hub_hardsigmoid(T(fg_in))
    fg_hx = T(fg) * T(hx)
    ng_ug_in = jnp.concatenate([T(fg_hx), T(x)], axis=1)
    ng = _hardtanh(T(jnp.dot(T(ng_ug_in), T(weight_n).T) + T(bias_n)))
    fg_ng = T(fg) * T(ng)
    fg_ng_inv = 0.0 - T(fg_ng)
    return _hardtanh(T(ng) + T(fg_ng_inv) + T(fg_hx))


if __name__ == "__main__":
    B, INPUT_SIZE, HIDDEN_SIZE, SEQ = 2, 16, 32, 8

    key = jax.random.PRNGKey(0)
    k1, k2, k3, k4, k5, k6, k7 = jax.random.split(key, 7)
    stdv = 1.0 / (HIDDEN_SIZE ** 0.5)

    # Deterministic truncated-normal init (mirrors reset_parameters()).
    weight_f = jax.random.truncated_normal(
        k1, -2.0, 2.0, (HIDDEN_SIZE, HIDDEN_SIZE + INPUT_SIZE), jnp.float32) * stdv
    weight_n = jax.random.truncated_normal(
        k2, -2.0, 2.0, (HIDDEN_SIZE, HIDDEN_SIZE + INPUT_SIZE), jnp.float32) * stdv
    bias_f = jax.random.truncated_normal(
        k3, -2.0, 2.0, (HIDDEN_SIZE,), jnp.float32) * stdv
    bias_n = jax.random.truncated_normal(
        k4, -2.0, 2.0, (HIDDEN_SIZE,), jnp.float32) * stdv

    x = jax.random.normal(k5, (B, INPUT_SIZE), jnp.float32)
    hx = jax.random.normal(k6, (B, HIDDEN_SIZE), jnp.float32)
    xs = jax.random.normal(k7, (SEQ, B, INPUT_SIZE), jnp.float32)

    # Single-step forward (module semantics).
    hy = hard_mgu_cell_fxp(x, hx, weight_f, weight_n, bias_f, bias_n)
    jax.block_until_ready(hy)
    assert hy.shape == (B, HIDDEN_SIZE) and hy.dtype == jnp.float32
    hy_ref = _reference_forward(x, hx, weight_f, weight_n, bias_f, bias_n)
    assert jnp.allclose(hy, hy_ref, atol=1e-5, rtol=0.0), "single-step mismatch"

    # Whole sequence, one kernel launch (recurrence inside the kernel).
    hs = hard_mgu_sequence_fxp(xs, hx, weight_f, weight_n, bias_f, bias_n)
    jax.block_until_ready(hs)
    assert hs.shape == (SEQ, B, HIDDEN_SIZE)
    h_ref = hx
    for t in range(SEQ):
        h_ref = _reference_forward(xs[t], h_ref, weight_f, weight_n, bias_f, bias_n)
        assert jnp.allclose(hs[t], h_ref, atol=1e-5, rtol=0.0), f"seq mismatch @t={t}"

    print("KERNEL_OK")
</pallas_src>

<mosaic_0001>
module attributes {stable_mosaic.version = 11 : i64} {
  func.func @mgu_seq_kernel(%arg0: i32, %arg1: i32, %arg2: memref<1x8x128xf32, #tpu.memory_space<vmem>>, %arg3: memref<1x8x128xf32, #tpu.memory_space<vmem>>, %arg4: memref<8x128xf32, #tpu.memory_space<vmem>>, %arg5: memref<128x128xbf16, #tpu.memory_space<vmem>>, %arg6: memref<128x128xbf16, #tpu.memory_space<vmem>>, %arg7: memref<1x8x128xf32, #tpu.memory_space<vmem>>, %arg8: memref<8x128xf32, #tpu.memory_space<vmem>>) attributes {dimension_semantics = [#tpu.dimension_semantics<parallel>, #tpu.dimension_semantics<arbitrary>], iteration_bounds = array<i64: 1, 1>, scalar_prefetch = 0 : i64, scratch_operands = 1 : i64, tpu.core_type = #tpu.core_type<tc>, window_params = [{transform_indices = @transform_0, window_bounds = array<i64: 1, 8, 128>}, {transform_indices = @transform_1, window_bounds = array<i64: 1, 8, 128>}, {transform_indices = @transform_2, window_bounds = array<i64: 8, 128>}, {pipeline_mode = #tpu.pipeline_mode<synchronous>, transform_indices = @transform_3, window_bounds = array<i64: 128, 128>}, {pipeline_mode = #tpu.pipeline_mode<synchronous>, transform_indices = @transform_4, window_bounds = array<i64: 128, 128>}, {transform_indices = @transform_5, window_bounds = array<i64: 1, 8, 128>}]} {
    %c0_i32 = arith.constant 0 : i32
    %0 = arith.cmpi eq, %arg1, %c0_i32 : i32
    %1 = arith.extui %0 : i1 to i32
    %c0_i32_0 = arith.constant 0 : i32
    %2 = arith.cmpi ne, %1, %c0_i32_0 : i32
    scf.if %2 {
      %c0_52 = arith.constant 0 : index
      %c0_53 = arith.constant 0 : index
      %98 = vector.load %arg4[%c0_52, %c0_53] : memref<8x128xf32, #tpu.memory_space<vmem>>, vector<8x128xf32>
      %c0_54 = arith.constant 0 : index
      %c0_55 = arith.constant 0 : index
      %99 = vector.load %arg8[%c0_54, %c0_55] : memref<8x128xf32, #tpu.memory_space<vmem>>, vector<8x128xf32>
      tpu.vector_store %arg8[%c0_54, %c0_55], %98 {strides = array<i32>} : memref<8x128xf32, #tpu.memory_space<vmem>>, vector<8x128xf32>,
    } else {
    }
    %c0 = arith.constant 0 : index
    %c0_1 = arith.constant 0 : index
    %3 = vector.load %arg8[%c0, %c0_1] : memref<8x128xf32, #tpu.memory_space<vmem>>, vector<8x128xf32>
    %cst = arith.constant 1.600000e+01 : f32
    %4 = vector.broadcast %cst : f32 to vector<8x128xf32>
    %5 = arith.mulf %3, %4 : vector<8x128xf32>
    %6 = math.roundeven %5 : vector<8x128xf32>
    %cst_2 = arith.constant -1.280000e+02 : f32
    %cst_3 = arith.constant 1.270000e+02 : f32
    %7 = vector.broadcast %cst_2 : f32 to vector<8x128xf32>
    %8 = arith.maximumf %7, %6 : vector<8x128xf32>
    %9 = vector.broadcast %cst_3 : f32 to vector<8x128xf32>
    %10 = arith.minimumf %9, %8 : vector<8x128xf32>
    %cst_4 = arith.constant 6.250000e-02 : f32
    %11 = vector.broadcast %cst_4 : f32 to vector<8x128xf32>
    %12 = arith.mulf %10, %11 : vector<8x128xf32>
    %13 = arith.truncf %12 : vector<8x128xf32> to vector<8x128xbf16>
    %c0_5 = arith.constant 0 : index
    %c0_6 = arith.constant 0 : index
    %14 = vector.load %arg5[%c0_5, %c0_6] : memref<128x128xbf16, #tpu.memory_space<vmem>>, vector<128x128xbf16>
    %cst_7 = arith.constant dense<0.000000e+00> : vector<8x128xf32>
    %15 = tpu.matmul %13, %14, %cst_7 {dimension_numbers = #tpu.dot_dimension_numbers<[1], [0], [0], [1], [0, 0, 1, 1], [], []>} : vector<8x128xbf16>, vector<128x128xbf16>, vector<8x128xf32> -> vector<8x128xf32>
    %c0_8 = arith.constant 0 : index
    %c0_9 = arith.constant 0 : index
    %c0_10 = arith.constant 0 : index
    %16 = vector.load %arg2[%c0_8, %c0_9, %c0_10] : memref<1x8x128xf32, #tpu.memory_space<vmem>>, vector<1x8x128xf32>
    %17 = vector.shape_cast %16 : vector<1x8x128xf32> to vector<8x128xf32>
    %18 = arith.addf %15, %17 : vector<8x128xf32>
    %cst_11 = arith.constant -1.000000e+00 : f32
    %cst_12 = arith.constant 1.000000e+00 : f32
    %19 = vector.broadcast %cst_11 : f32 to vector<8x128xf32>
    %20 = arith.maximumf %19, %18 : vector<8x128xf32>
    %21 = vector.broadcast %cst_12 : f32 to vector<8x128xf32>
    %22 = arith.minimumf %21, %20 : vector<8x128xf32>
    %cst_13 = arith.constant 1.600000e+01 : f32
    %23 = vector.broadcast %cst_13 : f32 to vector<8x128xf32>
    %24 = arith.mulf %22, %23 : vector<8x128xf32>
    %25 = math.roundeven %24 : vector<8x128xf32>
    %cst_14 = arith.constant -1.280000e+02 : f32
    %cst_15 = arith.constant 1.270000e+02 : f32
    %26 = vector.broadcast %cst_14 : f32 to vector<8x128xf32>
    %27 = arith.maximumf %26, %25 : vector<8x128xf32>
    %28 = vector.broadcast %cst_15 : f32 to vector<8x128xf32>
    %29 = arith.minimumf %28, %27 : vector<8x128xf32>
    %cst_16 = arith.constant 6.250000e-02 : f32
    %30 = vector.broadcast %cst_16 : f32 to vector<8x128xf32>
    %31 = arith.mulf %29, %30 : vector<8x128xf32>
    %cst_17 = arith.constant 5.000000e-01 : f32
    %32 = vector.broadcast %cst_17 : f32 to vector<8x128xf32>
    %33 = arith.mulf %31, %32 : vector<8x128xf32>
    %cst_18 = arith.constant 5.000000e-01 : f32
    %34 = vector.broadcast %cst_18 : f32 to vector<8x128xf32>
    %35 = arith.addf %33, %34 : vector<8x128xf32>
    %cst_19 = arith.constant 0.000000e+00 : f32
    %cst_20 = arith.constant 1.000000e+00 : f32
    %36 = vector.broadcast %cst_19 : f32 to vector<8x128xf32>
    %37 = arith.maximumf %36, %35 : vector<8x128xf32>
    %38 = vector.broadcast %cst_20 : f32 to vector<8x128xf32>
    %39 = arith.minimumf %38, %37 : vector<8x128xf32>
    %cst_21 = arith.constant 1.600000e+01 : f32
    %40 = vector.broadcast %cst_21 : f32 to vector<8x128xf32>
    %41 = arith.mulf %39, %40 : vector<8x128xf32>
    %42 = math.roundeven %41 : vector<8x128xf32>
    %cst_22 = arith.constant -1.280000e+02 : f32
    %cst_23 = arith.constant 1.270000e+02 : f32
    %43 = vector.broadcast %cst_22 : f32 to vector<8x128xf32>
    %44 = arith.maximumf %43, %42 : vector<8x128xf32>
    %45 = vector.broadcast %cst_23 : f32 to vector<8x128xf32>
    %46 = arith.minimumf %45, %44 : vector<8x128xf32>
    %cst_24 = arith.constant 6.250000e-02 : f32
    %47 = vector.broadcast %cst_24 : f32 to vector<8x128xf32>
    %48 = arith.mulf %46, %47 : vector<8x128xf32>
    %49 = arith.mulf %48, %12 : vector<8x128xf32>
    %cst_25 = arith.constant 1.600000e+01 : f32
    %50 = vector.broadcast %cst_25 : f32 to vector<8x128xf32>
    %51 = arith.mulf %49, %50 : vector<8x128xf32>
    %52 = math.roundeven %51 : vector<8x128xf32>
    %cst_26 = arith.constant -1.280000e+02 : f32
    %cst_27 = arith.constant 1.270000e+02 : f32
    %53 = vector.broadcast %cst_26 : f32 to vector<8x128xf32>
    %54 = arith.maximumf %53, %52 : vector<8x128xf32>
    %55 = vector.broadcast %cst_27 : f32 to vector<8x128xf32>
    %56 = arith.minimumf %55, %54 : vector<8x128xf32>
    %cst_28 = arith.constant 6.250000e-02 : f32
    %57 = vector.broadcast %cst_28 : f32 to vector<8x128xf32>
    %58 = arith.mulf %56, %57 : vector<8x128xf32>
    %59 = arith.truncf %58 : vector<8x128xf32> to vector<8x128xbf16>
    %c0_29 = arith.constant 0 : index
    %c0_30 = arith.constant 0 : index
    %60 = vector.load %arg6[%c0_29, %c0_30] : memref<128x128xbf16, #tpu.memory_space<vmem>>, vector<128x128xbf16>
    %cst_31 = arith.constant dense<0.000000e+00> : vector<8x128xf32>
    %61 = tpu.matmul %59, %60, %cst_31 {dimension_numbers = #tpu.dot_dimension_numbers<[1], [0], [0], [1], [0, 0, 1, 1], [], []>} : vector<8x128xbf16>, vector<128x128xbf16>, vector<8x128xf32> -> vector<8x128xf32>
    %c0_32 = arith.constant 0 : index
    %c0_33 = arith.constant 0 : index
    %c0_34 = arith.constant 0 : index
    %62 = vector.load %arg3[%c0_32, %c0_33, %c0_34] : memref<1x8x128xf32, #tpu.memory_space<vmem>>, vector<1x8x128xf32>
    %63 = vector.shape_cast %62 : vector<1x8x128xf32> to vector<8x128xf32>
    %64 = arith.addf %61, %63 : vector<8x128xf32>
    %cst_35 = arith.constant 1.600000e+01 : f32
    %65 = vector.broadcast %cst_35 : f32 to vector<8x128xf32>
    %66 = arith.mulf %64, %65 : vector<8x128xf32>
    %67 = math.roundeven %66 : vector<8x128xf32>
    %cst_36 = arith.constant -1.280000e+02 : f32
    %cst_37 = arith.constant 1.270000e+02 : f32
    %68 = vector.broadcast %cst_36 : f32 to vector<8x128xf32>
    %69 = arith.maximumf %68, %67 : vector<8x128xf32>
    %70 = vector.broadcast %cst_37 : f32 to vector<8x128xf32>
    %71 = arith.minimumf %70, %69 : vector<8x128xf32>
    %cst_38 = arith.constant 6.250000e-02 : f32
    %72 = vector.broadcast %cst_38 : f32 to vector<8x128xf32>
    %73 = arith.mulf %71, %72 : vector<8x128xf32>
    %cst_39 = arith.constant -1.000000e+00 : f32
    %cst_40 = arith.constant 1.000000e+00 : f32
    %74 = vector.broadcast %cst_39 : f32 to vector<8x128xf32>
    %75 = arith.maximumf %74, %73 : vector<8x128xf32>
    %76 = vector.broadcast %cst_40 : f32 to vector<8x128xf32>
    %77 = arith.minimumf %76, %75 : vector<8x128xf32>
    %78 = arith.mulf %48, %77 : vector<8x128xf32>
    %cst_41 = arith.constant 1.600000e+01 : f32
    %79 = vector.broadcast %cst_41 : f32 to vector<8x128xf32>
    %80 = arith.mulf %78, %79 : vector<8x128xf32>
    %81 = math.roundeven %80 : vector<8x128xf32>
    %cst_42 = arith.constant -1.280000e+02 : f32
    %cst_43 = arith.constant 1.270000e+02 : f32
    %82 = vector.broadcast %cst_42 : f32 to vector<8x128xf32>
    %83 = arith.maximumf %82, %81 : vector<8x128xf32>
    %84 = vector.broadcast %cst_43 : f32 to vector<8x128xf32>
    %85 = arith.minimumf %84, %83 : vector<8x128xf32>
    %cst_44 = arith.constant 6.250000e-02 : f32
    %86 = vector.broadcast %cst_44 : f32 to vector<8x128xf32>
    %87 = arith.mulf %85, %86 : vector<8x128xf32>
    %88 = arith.subf %77, %87 : vector<8x128xf32>
    %89 = arith.addf %88, %58 : vector<8x128xf32>
    %cst_45 = arith.constant -1.000000e+00 : f32
    %cst_46 = arith.constant 1.000000e+00 : f32
    %90 = vector.broadcast %cst_45 : f32 to vector<8x128xf32>
    %91 = arith.maximumf %90, %89 : vector<8x128xf32>
    %92 = vector.broadcast %cst_46 : f32 to vector<8x128xf32>
    %93 = arith.minimumf %92, %91 : vector<8x128xf32>
    %c0_47 = arith.constant 0 : index
    %c0_48 = arith.constant 0 : index
    %c0_49 = arith.constant 0 : index
    %94 = vector.load %arg7[%c0_47, %c0_48, %c0_49] : memref<1x8x128xf32, #tpu.memory_space<vmem>>, vector<1x8x128xf32>
    %95 = vector.shape_cast %94 : vector<1x8x128xf32> to vector<8x128xf32>
    %96 = vector.shape_cast %93 : vector<8x128xf32> to vector<1x8x128xf32>
    tpu.vector_store %arg7[%c0_47, %c0_48, %c0_49], %96 {strides = array<i32>} : memref<1x8x128xf32, #tpu.memory_space<vmem>>, vector<1x8x128xf32>,
    %c0_50 = arith.constant 0 : index
    %c0_51 = arith.constant 0 : index
    %97 = vector.load %arg8[%c0_50, %c0_51] : memref<8x128xf32, #tpu.memory_space<vmem>>, vector<8x128xf32>
    tpu.vector_store %arg8[%c0_50, %c0_51], %93 {strides = array<i32>} : memref<8x128xf32, #tpu.memory_space<vmem>>, vector<8x128xf32>,
    return
  }
  func.func @transform_0(%arg0: i32, %arg1: i32) -> (i32, i32, i32) {
    %c0_i32 = arith.constant 0 : i32
    %c0_i32_0 = arith.constant 0 : i32
    return %arg1, %arg0, %c0_i32 : i32, i32, i32
  }
  func.func @transform_1(%arg0: i32, %arg1: i32) -> (i32, i32, i32) {
    %c0_i32 = arith.constant 0 : i32
    %c0_i32_0 = arith.constant 0 : i32
    return %arg1, %arg0, %c0_i32 : i32, i32, i32
  }
  func.func @transform_2(%arg0: i32, %arg1: i32) -> (i32, i32) {
    %c0_i32 = arith.constant 0 : i32
    %c0_i32_0 = arith.constant 0 : i32
    return %arg0, %c0_i32 : i32, i32
  }
  func.func @transform_3(%arg0: i32, %arg1: i32) -> (i32, i32) {
    %c0_i32 = arith.constant 0 : i32
    %c0_i32_0 = arith.constant 0 : i32
    %c0_i32_1 = arith.constant 0 : i32
    return %c0_i32, %c0_i32_0 : i32, i32
  }
  func.func @transform_4(%arg0: i32, %arg1: i32) -> (i32, i32) {
    %c0_i32 = arith.constant 0 : i32
    %c0_i32_0 = arith.constant 0 : i32
    %c0_i32_1 = arith.constant 0 : i32
    return %c0_i32, %c0_i32_0 : i32, i32
  }
  func.func @transform_5(%arg0: i32, %arg1: i32) -> (i32, i32, i32) {
    %c0_i32 = arith.constant 0 : i32
    %c0_i32_0 = arith.constant 0 : i32
    return %arg1, %arg0, %c0_i32 : i32, i32, i32
  }
}

</mosaic_0001>

<llo_original>
// kernel: hard_mgu_sequence_fxp.1
$region0: #{hard_mgu_sequence_fxp.1}
  #allocation0 [shape = 'u32[]', space=smem, size = 0x4, offset = 0x4, fixed_abs, tag = 'smem constant byte address 0x4 - core index']
  #allocation1 [shape = 'u32[144,128]{1,0:T(1,128)}', space=vmem, size = 0x12000, scoped, tag = 'internal scratch']
  #allocation2 [shape = 'f32[8,128]{1,0:T(8,128)}', space=vmem, size = 0x1000, scoped, tag = 'scratch operand']
  %s0 = inlined_call_operand.vmem [shape: f32[1,8,128], index: 0, kind: input, shape index: {}]
  %s1 = inlined_call_operand.vmem [shape: f32[1,8,128], index: 1, kind: input, shape index: {}]
  %s2 = inlined_call_operand.vmem [shape: f32[8,128], index: 2, kind: input, shape index: {}]
  %s3 = inlined_call_operand.vmem [shape: bf16[128,128], index: 3, kind: input, shape index: {}]
  %s4 = inlined_call_operand.vmem [shape: bf16[128,128], index: 4, kind: input, shape index: {}]
  %s5 = inlined_call_operand.vmem [shape: f32[1,8,128], index: 5, kind: output, shape index: {}]
  %s6 = sld [smem:[#allocation0]]
  $region34: #{hard_mgu_sequence_fxp.1} parent=0
    _
  %s8 = ssub.s32 1, %s6
  %s9 = scalar_select 0, %s8, %s6
  // Predicated region
  $region2: #{hard_mgu_sequence_fxp.1} parent=0 // pred_check
    _
  $region3: #{hard_mgu_sequence_fxp.1} parent=0 // pred_check_branch
    %11 = sbr.rel (0) target = $region5
  $region4: #{hard_mgu_sequence_fxp.1} parent=0 // pred_region
    _
  $region5: #{hard_mgu_sequence_fxp.1} parent=0 // pred_fallthru
    _
  // Predicated region
  $region6: #{hard_mgu_sequence_fxp.1} parent=0 // pred_check
    _
  $region7: #{hard_mgu_sequence_fxp.1} parent=0 // pred_check_branch
    %13 = sbr.rel (0) target = $region9
  $region8: #{hard_mgu_sequence_fxp.1} parent=0 // pred_region
    _
  $region9: #{hard_mgu_sequence_fxp.1} parent=0 // pred_fallthru
    _
  // Predicated region
  $region10: #{hard_mgu_sequence_fxp.1} parent=0 // pred_check
    _
  $region11: #{hard_mgu_sequence_fxp.1} parent=0 // pred_check_branch
    %15 = sbr.rel (0) target = $region13
  $region12: #{hard_mgu_sequence_fxp.1} parent=0 // pred_region
    _
  $region13: #{hard_mgu_sequence_fxp.1} parent=0 // pred_fallthru
    _
  // Predicated region
  $region14: #{hard_mgu_sequence_fxp.1} parent=0 // pred_check
    _
  $region15: #{hard_mgu_sequence_fxp.1} parent=0 // pred_check_branch
    %17 = sbr.rel (0) target = $region17
  $region16: #{hard_mgu_sequence_fxp.1} parent=0 // pred_region
    _
  $region17: #{hard_mgu_sequence_fxp.1} parent=0 // pred_fallthru
    _
  // Predicated region
  $region18: #{hard_mgu_sequence_fxp.1} parent=0 // pred_check
    _
  $region19: #{hard_mgu_sequence_fxp.1} parent=0 // pred_check_branch
    %19 = sbr.rel (0) target = $region21
  $region20: #{hard_mgu_sequence_fxp.1} parent=0 // pred_region
    _
  $region21: #{hard_mgu_sequence_fxp.1} parent=0 // pred_fallthru
    _
  %p21 = scmp.eq.s32.totalorder 0, 0
  // Predicated region
  $region22: #{hard_mgu_sequence_fxp.1} parent=0 // pred_check
    %p22 = pneg %p21
  $region23: #{hard_mgu_sequence_fxp.1} parent=0 // pred_check_branch
    %24 = sbr.rel (%p22) target = $region25
  $region24: #{hard_mgu_sequence_fxp.1} parent=0 // pred_region
    %v25 = vld [vmem:[%s2] sm:$0xff]
    %26 = vst [vmem:[#allocation2] sm:$0xff] %v25
  $region25: #{hard_mgu_sequence_fxp.1} parent=0 // pred_fallthru
    _
  %v27 = vld [vmem:[#allocation2] sm:$0xff]
  %v28 = vmul.f32 %v27, 16.0
  %v29 = vround.ne.pseudo %v28
  %v30 = vmax.f32 %v29, -128.0
  %v31 = vmin.f32 %v30, 127.0
  %v32 = vmul.f32 %v31, 0.0625
  %v33 = vpack.c.bf16 %v32, %v32
  %v34 = vld [vmem:[%s3] sm:$0xf]
  %v35 = vld [vmem:[%s3 + $0x4] sm:$0xf]
  %v36 = vld [vmem:[%s3 + $0x8] sm:$0xf]
  %v37 = vld [vmem:[%s3 + $0xc] sm:$0xf]
  %v38 = vld [vmem:[%s3 + $0x10] sm:$0xf]
  %v39 = vld [vmem:[%s3 + $0x14] sm:$0xf]
  %v40 = vld [vmem:[%s3 + $0x18] sm:$0xf]
  %v41 = vld [vmem:[%s3 + $0x1c] sm:$0xf]
  %v42 = vld [vmem:[%s3 + $0x20] sm:$0xf]
  %v43 = vld [vmem:[%s3 + $0x24] sm:$0xf]
  %v44 = vld [vmem:[%s3 + $0x28] sm:$0xf]
  %v45 = vld [vmem:[%s3 + $0x2c] sm:$0xf]
  %v46 = vld [vmem:[%s3 + $0x30] sm:$0xf]
  %v47 = vld [vmem:[%s3 + $0x34] sm:$0xf]
  %v48 = vld [vmem:[%s3 + $0x38] sm:$0xf]
  %v49 = vld [vmem:[%s3 + $0x3c] sm:$0xf]
  %v50 = vld [vmem:[%s0] sm:$0xff]
  %v67 = vunpack.c.l.b16 %v34
  %v68 = vunpack.c.l.b16 %v35
  %v69 = vunpack.c.l.b16 %v36
  %v70 = vunpack.c.l.b16 %v37
  %v71 = vunpack.c.l.b16 %v38
  %v72 = vunpack.c.l.b16 %v39
  %v73 = vunpack.c.l.b16 %v40
  %v74 = vunpack.c.l.b16 %v41
  %v75 = vunpack.c.l.b16 %v42
  %v76 = vunpack.c.l.b16 %v43
  %v77 = vunpack.c.l.b16 %v44
  %v78 = vunpack.c.l.b16 %v45
  %v79 = vunpack.c.l.b16 %v46
  %v80 = vunpack.c.l.b16 %v47
  %v81 = vunpack.c.l.b16 %v48
  %v82 = vunpack.c.l.b16 %v49
  %v83 = vpack.c.b16 %v68, %v67
  %v84 = vpack.c.b16 %v70, %v69
  %v85 = vpack.c.b16 %v72, %v71
  %v86 = vpack.c.b16 %v74, %v73
  %v87 = vpack.c.b16 %v76, %v75
  %v88 = vpack.c.b16 %v78, %v77
  %v89 = vpack.c.b16 %v80, %v79
  %v90 = vpack.c.b16 %v82, %v81
  %99 = vmatprep.subr.bf16.mxu0 0
  %100 = vmatpush1.bf16.msra.mxu0 %v83
  %101 = vmatprep.subr.bf16.mxu0 0
  %102 = vmatpush1.bf16.msra.mxu0 %v84
  %103 = vmatprep.subr.bf16.mxu0 0
  %104 = vmatpush1.bf16.msra.mxu0 %v85
  %105 = vmatprep.subr.bf16.mxu0 0
  %106 = vmatpush1.bf16.msra.mxu0 %v86
  %107 = vmatprep.subr.bf16.mxu0 0
  %108 = vmatpush1.bf16.msra.mxu0 %v87
  %109 = vmatprep.subr.bf16.mxu0 0
  %110 = vmatpush1.bf16.msra.mxu0 %v88
  %111 = vmatprep.subr.bf16.mxu0 0
  %112 = vmatpush1.bf16.msra.mxu0 %v89
  %113 = vmatprep.subr.bf16.mxu0 0
  %114 = vmatpush1.bf16.msra.mxu0 %v90
  %115 = vmatprep.subr.bf16.mxu0 0
  %116 = vmatpush1.bf16.msra.mxu0 0
  %117 = vmatprep.subr.bf16.mxu0 0
  %118 = vmatpush1.bf16.msra.mxu0 0
  %119 = vmatprep.subr.bf16.mxu0 0
  %120 = vmatpush1.bf16.msra.mxu0 0
  %121 = vmatprep.subr.bf16.mxu0 0
  %122 = vmatpush1.bf16.msra.mxu0 0
  %123 = vmatprep.subr.bf16.mxu0 0
  %124 = vmatpush1.bf16.msra.mxu0 0
  %125 = vmatprep.subr.bf16.mxu0 0
  %126 = vmatpush1.bf16.msra.mxu0 0
  %127 = vmatprep.subr.bf16.mxu0 0
  %128 = vmatpush1.bf16.msra.mxu0 0
  %129 = vmatprep.subr.bf16.mxu0 0
  %130 = vmatpush1.bf16.msra.mxu0 0
  %131 = vmatprep.mubr.bf16.mxu0 0
  %132 = vmatmul.mubr.bf16.gmra.mrb[0].mxu0 %v33
  %v133 = vpop.f32.mrb[0].mxu0
  %v134 = vadd.f32 %v50, %v133
  %v135 = vpop.f32.mrb[0].mxu0
  %v136 = vpop.f32.mrb[0].mxu0
  %v137 = vpop.f32.mrb[0].mxu0
  %138 = vdwg.mxu0
  %v139 = vmax.f32 %v134, -1.0
  %v140 = vmin.f32 %v139, 1.0
  %v141 = vmul.f32 %v140, 16.0
  %v142 = vround.ne.pseudo %v141
  %v143 = vmax.f32 %v142, -128.0
  %v144 = vmin.f32 %v143, 127.0
  %v145 = vmul.f32 %v144, 0.0625
  %v146 = vmul.f32 %v145, 0.5
  %v147 = vadd.f32 %v146, 0.5
  %v148 = vmax.f32 %v147, 0.0
  %v149 = vmin.f32 %v148, 1.0
  %v150 = vmul.f32 %v149, 16.0
  %v151 = vround.ne.pseudo %v150
  %v152 = vmax.f32 %v151, -128.0
  %v153 = vmin.f32 %v152, 127.0
  %v154 = vmul.f32 %v153, 0.0625
  %v155 = vmul.f32 %v154, %v32
  %v156 = vmul.f32 %v155, 16.0
  %v157 = vround.ne.pseudo %v156
  %v158 = vmax.f32 %v157, -128.0
  %v159 = vmin.f32 %v158, 127.0
  %v160 = vmul.f32 %v159, 0.0625
  %v161 = vpack.c.bf16 %v160, %v160
  %v162 = vld [vmem:[%s4] sm:$0xf]
  %v163 = vld [vmem:[%s4 + $0x4] sm:$0xf]
  %v164 = vld [vmem:[%s4 + $0x8] sm:$0xf]
  %v165 = vld [vmem:[%s4 + $0xc] sm:$0xf]
  %v166 = vld [vmem:[%s4 + $0x10] sm:$0xf]
  %v167 = vld [vmem:[%s4 + $0x14] sm:$0xf]
  %v168 = vld [vmem:[%s4 + $0x18] sm:$0xf]
  %v169 = vld [vmem:[%s4 + $0x1c] sm:$0xf]
  %v170 = vld [vmem:[%s4 + $0x20] sm:$0xf]
  %v171 = vld [vmem:[%s4 + $0x24] sm:$0xf]
  %v172 = vld [vmem:[%s4 + $0x28] sm:$0xf]
  %v173 = vld [vmem:[%s4 + $0x2c] sm:$0xf]
  %v174 = vld [vmem:[%s4 + $0x30] sm:$0xf]
  %v175 = vld [vmem:[%s4 + $0x34] sm:$0xf]
  %v176 = vld [vmem:[%s4 + $0x38] sm:$0xf]
  %v177 = vld [vmem:[%s4 + $0x3c] sm:$0xf]
  %v178 = vld [vmem:[%s1] sm:$0xff]
  %v195 = vunpack.c.l.b16 %v162
  %v196 = vunpack.c.l.b16 %v163
  %v197 = vunpack.c.l.b16 %v164
  %v198 = vunpack.c.l.b16 %v165
  %v199 = vunpack.c.l.b16 %v166
  %v200 = vunpack.c.l.b16 %v167
  %v201 = vunpack.c.l.b16 %v168
  %v202 = vunpack.c.l.b16 %v169
  %v203 = vunpack.c.l.b16 %v170
  %v204 = vunpack.c.l.b16 %v171
  %v205 = vunpack.c.l.b16 %v172
  %v206 = vunpack.c.l.b16 %v173
  %v207 = vunpack.c.l.b16 %v174
  %v208 = vunpack.c.l.b16 %v175
  %v209 = vunpack.c.l.b16 %v176
  %v210 = vunpack.c.l.b16 %v177
  %v211 = vpack.c.b16 %v196, %v195
  %v212 = vpack.c.b16 %v198, %v197
  %v213 = vpack.c.b16 %v200, %v199
  %v214 = vpack.c.b16 %v202, %v201
  %v215 = vpack.c.b16 %v204, %v203
  %v216 = vpack.c.b16 %v206, %v205
  %v217 = vpack.c.b16 %v208, %v207
  %v218 = vpack.c.b16 %v210, %v209
  %227 = vmatprep.subr.bf16.mxu0 0
  %228 = vmatpush1.bf16.msra.mxu0 %v211
  %229 = vmatprep.subr.bf16.mxu0 0
  %230 = vmatpush1.bf16.msra.mxu0 %v212
  %231 = vmatprep.subr.bf16.mxu0 0
  %232 = vmatpush1.bf16.msra.mxu0 %v213
  %233 = vmatprep.subr.bf16.mxu0 0
  %234 = vmatpush1.bf16.msra.mxu0 %v214
  %235 = vmatprep.subr.bf16.mxu0 0
  %236 = vmatpush1.bf16.msra.mxu0 %v215
  %237 = vmatprep.subr.bf16.mxu0 0
  %238 = vmatpush1.bf16.msra.mxu0 %v216
  %239 = vmatprep.subr.bf16.mxu0 0
  %240 = vmatpush1.bf16.msra.mxu0 %v217
  %241 = vmatprep.subr.bf16.mxu0 0
  %242 = vmatpush1.bf16.msra.mxu0 %v218
  %243 = vmatprep.subr.bf16.mxu0 0
  %244 = vmatpush1.bf16.msra.mxu0 0
  %245 = vmatprep.subr.bf16.mxu0 0
  %246 = vmatpush1.bf16.msra.mxu0 0
  %247 = vmatprep.subr.bf16.mxu0 0
  %248 = vmatpush1.bf16.msra.mxu0 0
  %249 = vmatprep.subr.bf16.mxu0 0
  %250 = vmatpush1.bf16.msra.mxu0 0
  %251 = vmatprep.subr.bf16.mxu0 0
  %252 = vmatpush1.bf16.msra.mxu0 0
  %253 = vmatprep.subr.bf16.mxu0 0
  %254 = vmatpush1.bf16.msra.mxu0 0
  %255 = vmatprep.subr.bf16.mxu0 0
  %256 = vmatpush1.bf16.msra.mxu0 0
  %257 = vmatprep.subr.bf16.mxu0 0
  %258 = vmatpush1.bf16.msra.mxu0 0
  %259 = vmatprep.mubr.bf16.mxu0 0
  %260 = vmatmul.mubr.bf16.gmra.mrb[0].mxu0 %v161
  %v261 = vpop.f32.mrb[0].mxu0
  %v262 = vadd.f32 %v178, %v261
  %v263 = vpop.f32.mrb[0].mxu0
  %v264 = vpop.f32.mrb[0].mxu0
  %v265 = vpop.f32.mrb[0].mxu0
  %266 = vdwg.mxu0
  %v267 = vmul.f32 %v262, 16.0
  %v268 = vround.ne.pseudo %v267
  %v269 = vmax.f32 %v268, -128.0
  %v270 = vmin.f32 %v269, 127.0
  %v271 = vmul.f32 %v270, 0.0625
  %v272 = vmax.f32 %v271, -1.0
  %v273 = vmin.f32 %v272, 1.0
  %v274 = vmul.f32 %v154, %v273
  %v275 = vmul.f32 %v274, 16.0
  %v276 = vround.ne.pseudo %v275
  %v277 = vmax.f32 %v276, -128.0
  %v278 = vmin.f32 %v277, 127.0
  %v279 = vmul.f32 %v278, 0.0625
  %v280 = vsub.f32 %v273, %v279
  %v281 = vadd.f32 %v280, %v160
  %v282 = vmax.f32 %v281, -1.0
  %v283 = vmin.f32 %v282, 1.0
  %284 = vst [vmem:[%s5] sm:$0xff] %v283
  %285 = vst [vmem:[#allocation2] sm:$0xff] %v283
  // Predicated region
  $region26: #{hard_mgu_sequence_fxp.1} parent=0 // pred_check
    _
  $region27: #{hard_mgu_sequence_fxp.1} parent=0 // pred_check_branch
    %287 = sbr.rel (0) target = $region29
  $region28: #{hard_mgu_sequence_fxp.1} parent=0 // pred_region
    _
  $region29: #{hard_mgu_sequence_fxp.1} parent=0 // pred_fallthru
    _
  // Predicated region
  $region30: #{hard_mgu_sequence_fxp.1} parent=0 // pred_check
    _
  $region31: #{hard_mgu_sequence_fxp.1} parent=0 // pred_check_branch
    %289 = sbr.rel (0) target = $region33
  $region32: #{hard_mgu_sequence_fxp.1} parent=0 // pred_region
    _
  $region33: #{hard_mgu_sequence_fxp.1} parent=0 // pred_fallthru
    _

</llo_original>
